<compile_context>
chip_gen: v6e
topology: v6e:2x2x1
jax: 0.10.0
libtpu: 0.0.40
codegen_flags: <defaults>
</compile_context>

<pallas_src>
import functools

import jax
import jax.numpy as jnp
from jax import lax
from jax.experimental import pallas as pl
from jax.experimental.pallas import tpu as pltpu


def _round_up(x, m):
    return (x + m - 1) // m * m


# ----------------------------- Pallas kernels -----------------------------

def _matmul_bias_act_kernel(a_ref, b_ref, bias_ref, o_ref, acc_ref, *, tk, neg_slope):
    """(tm, tk) x (Kp-resident weight sliced to (tk, tn)) MXU matmul, accumulated
    across the K grid axis in an f32 VMEM scratch; bias + optional LeakyReLU
    fused on the last K step; bf16 output store."""
    k = pl.program_id(2)
    koff = pl.multiple_of(k * tk, tk)
    b_blk = b_ref[pl.ds(koff, tk), :]                       # weight stays VMEM-resident
    prod = jnp.dot(a_ref[...], b_blk, preferred_element_type=jnp.float32)

    @pl.when(k == 0)
    def _():
        acc_ref[...] = prod

    @pl.when(k > 0)
    def _():
        acc_ref[...] += prod

    @pl.when(k == pl.num_programs(2) - 1)
    def _():
        y = acc_ref[...] + bias_ref[...]
        if neg_slope is not None:
            y = jnp.where(y >= 0.0, y, neg_slope * y)
        o_ref[...] = y.astype(o_ref.dtype)


def _in_stats_kernel(x_ref, mean_ref, rstd_ref, sum_ref, sq_ref, *, n_valid, eps):
    """Pass 1 of instance norm: accumulate per-(n, channel) sum / sum-sq over
    spatially tiled blocks (padded spatial rows are zeros), emit mean & rstd on
    the last spatial step.  Stats math is f32."""
    s = pl.program_id(2)
    x = x_ref[0].astype(jnp.float32)                        # (ts, tc)
    psum = jnp.sum(x, axis=0, keepdims=True)                # (1, tc)
    psq = jnp.sum(x * x, axis=0, keepdims=True)

    @pl.when(s == 0)
    def _():
        sum_ref[...] = psum
        sq_ref[...] = psq

    @pl.when(s > 0)
    def _():
        sum_ref[...] += psum
        sq_ref[...] += psq

    @pl.when(s == pl.num_programs(2) - 1)
    def _():
        inv_n = 1.0 / float(n_valid)
        mean = sum_ref[...] * inv_n
        var = jnp.maximum(sq_ref[...] * inv_n - mean * mean, 0.0)
        mean_ref[0] = mean
        rstd_ref[0] = lax.rsqrt(var + eps)


def _in_apply_kernel(x_ref, mean_ref, rstd_ref, o_ref, *, neg_slope):
    """Pass 2 of instance norm: elementwise (x - mean) * rstd + LeakyReLU, bf16 out."""
    x = x_ref[0].astype(jnp.float32)                        # (ts, tc)
    y = (x - mean_ref[0]) * rstd_ref[0]
    o_ref[0] = jnp.where(y >= 0.0, y, neg_slope * y).astype(o_ref.dtype)


def _avgpool_kernel(t_ref, hinv_ref, winv_ref, o_ref):
    """Sum the 9 shifted taps (leading axis) and scale by the separable inverse
    valid count: per-row 1/hc (tr, 1) x per-lane 1/wc (1, tl).
    Rows = (n, oh), lanes = (ow, c): lane-dense in and out."""
    s = jnp.sum(t_ref[...], axis=0)                         # (tr, tl)
    o_ref[...] = (s * hinv_ref[...]) * winv_ref[...]


# ----------------------------- wrappers (glue) -----------------------------

def _extract_patches(x, kh, kw, stride, pad):
    """x: (N, H, W, C) -> (N, OH, OW, kh*kw, C) patches (zero padding)."""
    N, H, W, C = x.shape
    xp = jnp.pad(x, ((0, 0), (pad, pad), (pad, pad), (0, 0)))
    OH = (H + 2 * pad - kh) // stride + 1
    OW = (W + 2 * pad - kw) // stride + 1
    cols = []
    for i in range(kh):
        for j in range(kw):
            cols.append(xp[:, i:i + stride * OH:stride, j:j + stride * OW:stride, :])
    return jnp.stack(cols, axis=3), OH, OW


def conv2d(x, w, b, stride, pad, neg_slope=None, tm_max=512, tn_max=512, tk_max=512):
    """x: (N,H,W,C) NHWC; w: (Cout, Cin, KH, KW) (PyTorch layout); b: (Cout,).
    Returns bf16 NHWC output."""
    N, H, W, Cin = x.shape
    Cout, _, kh, kw = w.shape

    # im2col in bf16 (MXU-native).  TODO(synk): implicit in-kernel im2col.
    patches, OH, OW = _extract_patches(x.astype(jnp.bfloat16), kh, kw, stride, pad)
    A = patches.reshape(N * OH * OW, kh * kw * Cin)
    Wm = jnp.transpose(w, (2, 3, 1, 0)).reshape(kh * kw * Cin, Cout).astype(jnp.bfloat16)

    M, K = A.shape
    # Pad only to layout requirements.
    Kp = _round_up(K, 128)
    tk = min(tk_max, Kp)
    Kp = _round_up(Kp, tk)
    Mp = _round_up(M, 16)
    tm = min(tm_max, Mp)
    Mp = _round_up(Mp, tm)
    Np = _round_up(Cout, 128)
    tn = min(tn_max, Np)        # tn_max=512 -> every layer has a single N tile
    Np = _round_up(Np, tn)

    if (Mp, Kp) != (M, K):
        A = jnp.pad(A, ((0, Mp - M), (0, Kp - K)))
    if (Kp, Np) != (K, Cout):
        Wm = jnp.pad(Wm, ((0, Kp - K), (0, Np - Cout)))
    biasp = jnp.pad(b.astype(jnp.float32), (0, Np - Cout)).reshape(1, Np)

    out = pl.pallas_call(
        functools.partial(_matmul_bias_act_kernel, tk=tk, neg_slope=neg_slope),
        out_shape=jax.ShapeDtypeStruct((Mp, Np), jnp.bfloat16),
        grid=(Mp // tm, Np // tn, Kp // tk),
        in_specs=[pl.BlockSpec((tm, tk), lambda i, j, k: (i, k)),
                  # Full-K weight slab, index map ignores (i, k) -> VMEM-resident.
                  pl.BlockSpec((Kp, tn), lambda i, j, k: (0, j)),
                  pl.BlockSpec((1, tn), lambda i, j, k: (0, j))],
        out_specs=pl.BlockSpec((tm, tn), lambda i, j, k: (i, j)),
        scratch_shapes=[pltpu.VMEM((tm, tn), jnp.float32)],
        compiler_params=pltpu.CompilerParams(
            dimension_semantics=("parallel", "parallel", "arbitrary"),
            vmem_limit_bytes=48 * 1024 * 1024),
    )(A, Wm, biasp)
    return out[:M, :Cout].reshape(N, OH, OW, Cout)


def instance_norm_lrelu(x, neg_slope=0.2, eps=1e-5):
    """InstanceNorm2d(affine=False) + LeakyReLU(0.2), NHWC, spatially tiled
    two-pass implementation.  Accepts/returns bf16 (stats computed in f32)."""
    N, H, W, C = x.shape
    S = H * W
    Cp = _round_up(C, 128)
    tc = 128
    ts = min(1024, _round_up(S, 8))
    Sp = _round_up(S, ts)

    xr = x.reshape(N, S, C)
    if (Sp, Cp) != (S, C):
        xr = jnp.pad(xr, ((0, 0), (0, Sp - S), (0, Cp - C)))   # padded rows are zeros
    grid = (N, Cp // tc, Sp // ts)

    mean, rstd = pl.pallas_call(
        functools.partial(_in_stats_kernel, n_valid=S, eps=eps),
        out_shape=(jax.ShapeDtypeStruct((N, 1, Cp), jnp.float32),
                   jax.ShapeDtypeStruct((N, 1, Cp), jnp.float32)),
        grid=grid,
        in_specs=[pl.BlockSpec((1, ts, tc), lambda n, c, s: (n, s, c))],
        out_specs=(pl.BlockSpec((1, 1, tc), lambda n, c, s: (n, 0, c)),
                   pl.BlockSpec((1, 1, tc), lambda n, c, s: (n, 0, c))),
        scratch_shapes=[pltpu.VMEM((1, tc), jnp.float32),
                        pltpu.VMEM((1, tc), jnp.float32)],
        compiler_params=pltpu.CompilerParams(
            dimension_semantics=("parallel", "parallel", "arbitrary")),
    )(xr)

    out = pl.pallas_call(
        functools.partial(_in_apply_kernel, neg_slope=neg_slope),
        out_shape=jax.ShapeDtypeStruct((N, Sp, Cp), x.dtype),
        grid=grid,
        in_specs=[pl.BlockSpec((1, ts, tc), lambda n, c, s: (n, s, c)),
                  pl.BlockSpec((1, 1, tc), lambda n, c, s: (n, 0, c)),
                  pl.BlockSpec((1, 1, tc), lambda n, c, s: (n, 0, c))],
        out_specs=pl.BlockSpec((1, ts, tc), lambda n, c, s: (n, s, c)),
        compiler_params=pltpu.CompilerParams(
            dimension_semantics=("parallel", "parallel", "parallel")),
    )(xr, mean, rstd)
    return out[:, :S, :C].reshape(N, H, W, C)


def avg_pool_3x3_s2(x):
    """AvgPool2d(3, stride=2, padding=1, count_include_pad=False). x: (N,H,W,C) f32."""
    N, H, W, C = x.shape
    OH = (H + 2 - 3) // 2 + 1
    OW = (W + 2 - 3) // 2 + 1
    xp = jnp.pad(x, ((0, 0), (1, 1), (1, 1), (0, 0)))

    # 9 stride-2 shifted taps, each (N, OH, OW, C), stacked lane-dense.
    # TODO(synk): replace with in-kernel strided tap reads to avoid the 9x stack.
    taps = []
    for di in range(3):
        for dj in range(3):
            taps.append(xp[:, di:di + 2 * (OH - 1) + 1:2,
                           dj:dj + 2 * (OW - 1) + 1:2, :])
    T = jnp.stack(taps, axis=0).reshape(9, N * OH, OW * C)

    R, L = N * OH, OW * C
    tl = min(512, _round_up(L, 128))
    Lp = _round_up(L, tl)
    tr = min(128, _round_up(R, 8))
    Rp = _round_up(R, tr)

    # Separable inverse valid counts (count_include_pad=False): count = hc * wc.
    oh = jnp.arange(OH)
    ow = jnp.arange(OW)
    hc = (jnp.minimum(2 * oh + 2, H) - jnp.maximum(2 * oh - 1, 0)).astype(jnp.float32)
    wc = (jnp.minimum(2 * ow + 2, W) - jnp.maximum(2 * ow - 1, 0)).astype(jnp.float32)
    hinv = jnp.pad(1.0 / jnp.tile(hc, N), (0, Rp - R), constant_values=1.0).reshape(Rp, 1)
    winv = jnp.pad(1.0 / jnp.repeat(wc, C), (0, Lp - L), constant_values=1.0).reshape(1, Lp)

    if (Rp, Lp) != (R, L):
        T = jnp.pad(T, ((0, 0), (0, Rp - R), (0, Lp - L)))

    out = pl.pallas_call(
        _avgpool_kernel,
        out_shape=jax.ShapeDtypeStruct((Rp, Lp), jnp.float32),
        grid=(Rp // tr, Lp // tl),
        in_specs=[pl.BlockSpec((9, tr, tl), lambda r, l: (0, r, l)),
                  pl.BlockSpec((tr, 1), lambda r, l: (r, 0)),
                  pl.BlockSpec((1, tl), lambda r, l: (0, l))],
        out_specs=pl.BlockSpec((tr, tl), lambda r, l: (r, l)),
        compiler_params=pltpu.CompilerParams(
            dimension_semantics=("parallel", "parallel")),
    )(T, hinv, winv)
    return out[:R, :L].reshape(N, OH, OW, C)


# ----------------------------- model definition -----------------------------

def init_nlayer_params(key, input_nc=6, ndf=64, n_layers=3):
    """Conv shapes exactly as NLayerDiscriminator.__init__ (kw=4, padw=2)."""
    specs = [(input_nc, ndf, 4, 2, 2)]                # conv0 (stride 2) + LeakyReLU
    nf = ndf
    for _ in range(1, n_layers):
        nf_prev, nf = nf, min(nf * 2, 512)
        specs.append((nf_prev, nf, 4, 2, 2))          # conv + InstanceNorm + LeakyReLU
    nf_prev, nf = nf, min(nf * 2, 512)
    specs.append((nf_prev, nf, 4, 1, 2))              # stride-1 conv + IN + LeakyReLU
    specs.append((nf, 1, 4, 1, 2))                    # final 1-channel conv

    params = []
    for (cin, cout, k, s, p) in specs:
        key, kw_, kb_ = jax.random.split(key, 3)
        w = jax.random.normal(kw_, (cout, cin, k, k), jnp.float32) * 0.02
        b = jax.random.normal(kb_, (cout,), jnp.float32) * 0.02
        params.append({'w': w, 'b': b, 'stride': s, 'pad': p})
    return params


def nlayer_forward(params, x):
    p0 = params[0]
    h = conv2d(x, p0['w'], p0['b'], p0['stride'], p0['pad'], neg_slope=0.2)
    for li in range(1, len(params) - 1):
        p = params[li]
        h = conv2d(h, p['w'], p['b'], p['stride'], p['pad'], neg_slope=None)
        h = instance_norm_lrelu(h, neg_slope=0.2)
    p = params[-1]
    return conv2d(h, p['w'], p['b'], p['stride'], p['pad'], neg_slope=None)


def multiscale_forward(all_params, x_nchw, num_D=2):
    """Matches MultiscaleDiscriminator.forward: [[D_{num_D-1}(x)], [D_{num_D-2}(down(x))], ...]."""
    x = jnp.transpose(x_nchw, (0, 2, 3, 1)).astype(jnp.float32)   # NCHW -> NHWC once
    result = []
    xd = x
    for i in range(num_D):
        params = all_params[num_D - 1 - i]
        out = nlayer_forward(params, xd)
        result.append([jnp.transpose(out, (0, 3, 1, 2)).astype(jnp.float32)])  # NCHW
        if i != num_D - 1:
            xd = avg_pool_3x3_s2(xd)
    return result


# ----------------------------- pure-JAX reference -----------------------------

def _ref_conv(x, w, b, stride, pad):
    y = lax.conv_general_dilated(x, w, (stride, stride), [(pad, pad), (pad, pad)],
                                 dimension_numbers=('NCHW', 'OIHW', 'NCHW'),
                                 precision=lax.Precision.HIGHEST)
    return y + b[None, :, None, None]


def _ref_in_lrelu(x, eps=1e-5, ns=0.2):
    mean = jnp.mean(x, axis=(2, 3), keepdims=True)
    var = jnp.mean((x - mean) ** 2, axis=(2, 3), keepdims=True)
    y = (x - mean) / jnp.sqrt(var + eps)
    return jnp.where(y >= 0, y, ns * y)


def _ref_avgpool(x):
    win, strd = (1, 1, 3, 3), (1, 1, 2, 2)
    pad = [(0, 0), (0, 0), (1, 1), (1, 1)]
    s = lax.reduce_window(x, 0.0, lax.add, win, strd, pad)
    c = lax.reduce_window(jnp.ones_like(x), 0.0, lax.add, win, strd, pad)
    return s / c


def _ref_nlayer(params, x):
    p0 = params[0]
    h = _ref_conv(x, p0['w'], p0['b'], p0['stride'], p0['pad'])
    h = jnp.where(h >= 0, h, 0.2 * h)
    for li in range(1, len(params) - 1):
        p = params[li]
        h = _ref_conv(h, p['w'], p['b'], p['stride'], p['pad'])
        h = _ref_in_lrelu(h)
    p = params[-1]
    return _ref_conv(h, p['w'], p['b'], p['stride'], p['pad'])


def _ref_multiscale(all_params, x, num_D=2):
    res, xd = [], x
    for i in range(num_D):
        res.append([_ref_nlayer(all_params[num_D - 1 - i], xd)])
        if i != num_D - 1:
            xd = _ref_avgpool(xd)
    return res


# ----------------------------- main -----------------------------

if __name__ == "__main__":
    key = jax.random.PRNGKey(0)
    k_x, k_p0, k_p1 = jax.random.split(key, 3)

    # PyTorch-style NCHW input: batch=2, input_nc=6, spatial=16x16
    x = jax.random.normal(k_x, (2, 6, 16, 16), jnp.float32)

    # num_D = 2 independent NLayerDiscriminators ("layer0", "layer1")
    all_params = [init_nlayer_params(k_p0), init_nlayer_params(k_p1)]

    out = multiscale_forward(all_params, x, num_D=2)
    out = jax.block_until_ready(out)

    # sanity-check against a pure-JAX f32 reference (matmuls run bf16 on the MXU
    # with f32 accumulation and activations are stored bf16, so the tolerance is
    # looser than pure f32).
    ref = _ref_multiscale(all_params, x, num_D=2)
    for got, want in zip(out, ref):
        g, r = got[0], want[0]
        assert g.shape == r.shape, (g.shape, r.shape)
        err = float(jnp.max(jnp.abs(g - r)))
        assert jnp.allclose(g, r, rtol=1e-1, atol=1e-1), f"max abs err {err}"

    print("KERNEL_OK")
</pallas_src>

<mosaic_0001>
module attributes {stable_mosaic.version = 11 : i64} {
  func.func @_matmul_bias_act_kernel(%arg0: i32, %arg1: i32, %arg2: i32, %arg3: memref<176x128xbf16, #tpu.memory_space<vmem>>, %arg4: memref<128x128xbf16, #tpu.memory_space<vmem>>, %arg5: memref<1x128xf32, #tpu.memory_space<vmem>>, %arg6: memref<176x128xbf16, #tpu.memory_space<vmem>>, %arg7: memref<176x128xf32, #tpu.memory_space<vmem>>) attributes {dimension_semantics = [#tpu.dimension_semantics<parallel>, #tpu.dimension_semantics<parallel>, #tpu.dimension_semantics<arbitrary>], iteration_bounds = array<i64: 1, 1, 1>, scalar_prefetch = 0 : i64, scratch_operands = 1 : i64, tpu.core_type = #tpu.core_type<tc>, window_params = [{transform_indices = @transform_0, window_bounds = array<i64: 176, 128>}, {transform_indices = @transform_1, window_bounds = array<i64: 128, 128>}, {transform_indices = @transform_2, window_bounds = array<i64: 1, 128>}, {transform_indices = @transform_3, window_bounds = array<i64: 176, 128>}]} {
    %c128_i32 = arith.constant 128 : i32
    %0 = arith.muli %arg2, %c128_i32 : i32
    %1 = tpu.assume_multiple %0, 128 : i32
    %2 = arith.index_cast %1 : i32 to index
    %c0 = arith.constant 0 : index
    %3 = vector.load %arg4[%2, %c0] : memref<128x128xbf16, #tpu.memory_space<vmem>>, vector<128x128xbf16>
    %c0_0 = arith.constant 0 : index
    %c0_1 = arith.constant 0 : index
    %4 = vector.load %arg3[%c0_0, %c0_1] : memref<176x128xbf16, #tpu.memory_space<vmem>>, vector<176x128xbf16>
    %cst = arith.constant dense<0.000000e+00> : vector<176x128xf32>
    %5 = tpu.matmul %4, %3, %cst {dimension_numbers = #tpu.dot_dimension_numbers<[1], [0], [0], [1], [0, 0, 1, 1], [], []>} : vector<176x128xbf16>, vector<128x128xbf16>, vector<176x128xf32> -> vector<176x128xf32>
    %c0_i32 = arith.constant 0 : i32
    %6 = arith.cmpi eq, %arg2, %c0_i32 : i32
    %7 = arith.extui %6 : i1 to i32
    %c0_i32_2 = arith.constant 0 : i32
    %8 = arith.cmpi ne, %7, %c0_i32_2 : i32
    scf.if %8 {
      %c0_7 = arith.constant 0 : index
      %c0_8 = arith.constant 0 : index
      %15 = vector.load %arg7[%c0_7, %c0_8] : memref<176x128xf32, #tpu.memory_space<vmem>>, vector<176x128xf32>
      tpu.vector_store %arg7[%c0_7, %c0_8], %5 {strides = array<i32>} : memref<176x128xf32, #tpu.memory_space<vmem>>, vector<176x128xf32>,
    } else {
    }
    %c0_i32_3 = arith.constant 0 : i32
    %9 = arith.cmpi sgt, %arg2, %c0_i32_3 : i32
    %10 = arith.extui %9 : i1 to i32
    %c0_i32_4 = arith.constant 0 : i32
    %11 = arith.cmpi ne, %10, %c0_i32_4 : i32
    scf.if %11 {
      %c0_7 = arith.constant 0 : index
      %c0_8 = arith.constant 0 : index
      %15 = vector.load %arg7[%c0_7, %c0_8] : memref<176x128xf32, #tpu.memory_space<vmem>>, vector<176x128xf32>
      %16 = arith.addf %15, %5 : vector<176x128xf32>
      %c0_9 = arith.constant 0 : index
      %c0_10 = arith.constant 0 : index
      %17 = vector.load %arg7[%c0_9, %c0_10] : memref<176x128xf32, #tpu.memory_space<vmem>>, vector<176x128xf32>
      tpu.vector_store %arg7[%c0_9, %c0_10], %16 {strides = array<i32>} : memref<176x128xf32, #tpu.memory_space<vmem>>, vector<176x128xf32>,
    } else {
    }
    %c0_i32_5 = arith.constant 0 : i32
    %12 = arith.cmpi eq, %arg2, %c0_i32_5 : i32
    %13 = arith.extui %12 : i1 to i32
    %c0_i32_6 = arith.constant 0 : i32
    %14 = arith.cmpi ne, %13, %c0_i32_6 : i32
    scf.if %14 {
      %c0_7 = arith.constant 0 : index
      %c0_8 = arith.constant 0 : index
      %15 = vector.load %arg7[%c0_7, %c0_8] : memref<176x128xf32, #tpu.memory_space<vmem>>, vector<176x128xf32>
      %c0_9 = arith.constant 0 : index
      %c0_10 = arith.constant 0 : index
      %16 = vector.load %arg5[%c0_9, %c0_10] : memref<1x128xf32, #tpu.memory_space<vmem>>, vector<1x128xf32>
      %17 = vector.broadcast %16 : vector<1x128xf32> to vector<176x128xf32>
      %18 = arith.addf %15, %17 : vector<176x128xf32>
      %cst_11 = arith.constant 0.000000e+00 : f32
      %19 = vector.broadcast %cst_11 : f32 to vector<176x128xf32>
      %20 = arith.cmpf oge, %18, %19 : vector<176x128xf32>
      %cst_12 = arith.constant 2.000000e-01 : f32
      %21 = vector.broadcast %cst_12 : f32 to vector<176x128xf32>
      %22 = arith.mulf %21, %18 : vector<176x128xf32>
      %23 = arith.select %20, %18, %22 : vector<176x128xi1>, vector<176x128xf32>
      %24 = arith.truncf %23 : vector<176x128xf32> to vector<176x128xbf16>
      %c0_13 = arith.constant 0 : index
      %c0_14 = arith.constant 0 : index
      %25 = vector.load %arg6[%c0_13, %c0_14] : memref<176x128xbf16, #tpu.memory_space<vmem>>, vector<176x128xbf16>
      tpu.vector_store %arg6[%c0_13, %c0_14], %24 {strides = array<i32>} : memref<176x128xbf16, #tpu.memory_space<vmem>>, vector<176x128xbf16>,
    } else {
    }
    return
  }
  func.func @transform_0(%arg0: i32, %arg1: i32, %arg2: i32) -> (i32, i32) {
    %c0_i32 = arith.constant 0 : i32
    return %arg0, %arg2 : i32, i32
  }
  func.func @transform_1(%arg0: i32, %arg1: i32, %arg2: i32) -> (i32, i32) {
    %c0_i32 = arith.constant 0 : i32
    %c0_i32_0 = arith.constant 0 : i32
    return %c0_i32, %arg1 : i32, i32
  }
  func.func @transform_2(%arg0: i32, %arg1: i32, %arg2: i32) -> (i32, i32) {
    %c0_i32 = arith.constant 0 : i32
    %c0_i32_0 = arith.constant 0 : i32
    return %c0_i32, %arg1 : i32, i32
  }
  func.func @transform_3(%arg0: i32, %arg1: i32, %arg2: i32) -> (i32, i32) {
    %c0_i32 = arith.constant 0 : i32
    return %arg0, %arg1 : i32, i32
  }
}

</mosaic_0001>

<llo_original>
// kernel: tpu_custom_call.1
$region0: #{tpu_custom_call.1}
  #allocation0 [shape = 'u32[]', space=smem, size = 0x4, offset = 0x4, fixed_abs, tag = 'smem constant byte address 0x4 - core index']
  #allocation1 [shape = 'u32[144,128]{1,0:T(1,128)}', space=vmem, size = 0x12000, scoped, tag = 'internal scratch']
  #allocation2 [shape = 'f32[176,128]{1,0:T(8,128)}', space=vmem, size = 0x16000, scoped, tag = 'scratch operand']
  %s0 = inlined_call_operand.hbm [shape: bf16[176,128], index: 0, kind: input, shape index: {}]
  %s1 = inlined_call_operand.hbm [shape: bf16[128,128], index: 1, kind: input, shape index: {}]
  %s2 = inlined_call_operand.vmem [shape: f32[1,128], index: 2, kind: input, shape index: {}]
  %s3 = inlined_call_operand.hbm [shape: bf16[176,128], index: 3, kind: output, shape index: {}]
  %s4 = sld [smem:[#allocation0]]
  $region42: #{tpu_custom_call.1} parent=0
    _
  %s6 = ssub.s32 1, %s4
  %s7 = scalar_select 0, %s6, %s4
  $region1: #{tpu_custom_call.1} parent=0
    #allocation3 [shape = 'u8[45056]{0}', space=vmem, size = 0xb000, scoped, tag = 'input window, operand 0, single buffered']
    #allocation4 [shape = 's32[1]{0}', space=sflag, size = 0x4, scoped, tag = 'scoped memory for tpu_custom_call.1']
    #allocation5 [shape = 's32[1]{0}', space=sflag, size = 0x4, scoped, tag = 'scoped memory for tpu_custom_call.1']
    #allocation6 [shape = 'u8[32768]{0}', space=vmem, size = 0x8000, scoped, tag = 'input window, operand 1, single buffered']
    #allocation7 [shape = 's32[1]{0}', space=sflag, size = 0x4, scoped, tag = 'scoped memory for tpu_custom_call.1']
    #allocation8 [shape = 'u8[45056]{0}', space=vmem, size = 0xb000, scoped, tag = 'output window, operand 0, single buffered']
    %8 = vsyncpa [#allocation4], 0
    %9 = vsyncpa [#allocation7], 0
    %10 = vsyncpa [#allocation5], 0
    // Predicated region
    $region2: #{tpu_custom_call.1} parent=1 // pred_check
      _
    $region3: #{tpu_custom_call.1} parent=1 // pred_check_branch
      %12 = sbr.rel (0) target = $region5
    $region4: #{tpu_custom_call.1} parent=1 // pred_region
      %s14 = ssub.s32 1408, 1408
      %15 = vsyncadd [#allocation4], %s14
      %s16 = sshll.u32 [#allocation3], 4
      %s17 = int_to_ptr.vmem [resolvable:$true] %s16
      %22 = dma.hbm_to_vmem [thread:$0]  %s0, 1408, %s17, [#allocation4], 64, 64, 4
    $region5: #{tpu_custom_call.1} parent=1 // pred_fallthru
      _
    // Predicated region
    $region6: #{tpu_custom_call.1} parent=1 // pred_check
      _
    $region7: #{tpu_custom_call.1} parent=1 // pred_check_branch
      %24 = sbr.rel (0) target = $region9
    $region8: #{tpu_custom_call.1} parent=1 // pred_region
      %s26 = ssub.s32 1024, 1024
      %27 = vsyncadd [#allocation7], %s26
      %s28 = sshll.u32 [#allocation6], 4
      %s29 = int_to_ptr.vmem [resolvable:$true] %s28
      %34 = dma.hbm_to_vmem [thread:$0]  %s1, 1024, %s29, [#allocation7], 64, 64, 4
    $region9: #{tpu_custom_call.1} parent=1 // pred_fallthru
      _
    // Predicated region
    $region10: #{tpu_custom_call.1} parent=1 // pred_check
      _
    $region11: #{tpu_custom_call.1} parent=1 // pred_check_branch
      %36 = sbr.rel (0) target = $region13
    $region12: #{tpu_custom_call.1} parent=1 // pred_region
      _
    $region13: #{tpu_custom_call.1} parent=1 // pred_fallthru
      _
    // Predicated region
    $region14: #{tpu_custom_call.1} parent=1 // pred_check
      _
    $region15: #{tpu_custom_call.1} parent=1 // pred_check_branch
      %38 = sbr.rel (0) target = $region17
    $region16: #{tpu_custom_call.1} parent=1 // pred_region
      %39 = dma.done [#allocation4], 1408
    $region17: #{tpu_custom_call.1} parent=1 // pred_fallthru
      _
    // Predicated region
    $region18: #{tpu_custom_call.1} parent=1 // pred_check
      _
    $region19: #{tpu_custom_call.1} parent=1 // pred_check_branch
      %41 = sbr.rel (0) target = $region21
    $region20: #{tpu_custom_call.1} parent=1 // pred_region
      %42 = dma.done [#allocation7], 1024
    $region21: #{tpu_custom_call.1} parent=1 // pred_fallthru
      _
    %s44 = smul.u32 0, 128
    %s45 = sshra.s32 %s44, 3
    %s46 = sand.u32 %s44, 7
    %s47 = smul.addr %s45, 4
    %s48 = scalar_lea.vmem [#allocation6], %s47
    %v49 = vld [vmem:[%s48] sm:$0xf]
    %v50 = vld [vmem:[%s48 + $0x4] sm:$0xf]
    %v51 = vld [vmem:[%s48 + $0x8] sm:$0xf]
    %v52 = vld [vmem:[%s48 + $0xc] sm:$0xf]
    %v53 = vld [vmem:[%s48 + $0x10] sm:$0xf]
    %v54 = vld [vmem:[%s48 + $0x14] sm:$0xf]
    %v55 = vld [vmem:[%s48 + $0x18] sm:$0xf]
    %v56 = vld [vmem:[%s48 + $0x1c] sm:$0xf]
    %v57 = vld [vmem:[%s48 + $0x20] sm:$0xf]
    %v58 = vld [vmem:[%s48 + $0x24] sm:$0xf]
    %v59 = vld [vmem:[%s48 + $0x28] sm:$0xf]
    %v60 = vld [vmem:[%s48 + $0x2c] sm:$0xf]
    %v61 = vld [vmem:[%s48 + $0x30] sm:$0xf]
    %v62 = vld [vmem:[%s48 + $0x34] sm:$0xf]
    %v63 = vld [vmem:[%s48 + $0x38] sm:$0xf]
    %v64 = vld [vmem:[%s48 + $0x3c] sm:$0xf]
    %v65 = vld [vmem:[#allocation3] sm:$0xf]
    %v66 = vld [vmem:[#allocation3 + $0x4] sm:$0xf]
    %v67 = vld [vmem:[#allocation3 + $0x8] sm:$0xf]
    %v68 = vld [vmem:[#allocation3 + $0xc] sm:$0xf]
    %v69 = vld [vmem:[#allocation3 + $0x10] sm:$0xf]
    %v70 = vld [vmem:[#allocation3 + $0x14] sm:$0xf]
    %v71 = vld [vmem:[#allocation3 + $0x18] sm:$0xf]
    %v72 = vld [vmem:[#allocation3 + $0x1c] sm:$0xf]
    %v73 = vld [vmem:[#allocation3 + $0x20] sm:$0xf]
    %v74 = vld [vmem:[#allocation3 + $0x24] sm:$0xf]
    %v75 = vld [vmem:[#allocation3 + $0x28] sm:$0xf]
    %v76 = vld [vmem:[#allocation3 + $0x2c] sm:$0xf]
    %v77 = vld [vmem:[#allocation3 + $0x30] sm:$0xf]
    %v78 = vld [vmem:[#allocation3 + $0x34] sm:$0xf]
    %v79 = vld [vmem:[#allocation3 + $0x38] sm:$0xf]
    %v80 = vld [vmem:[#allocation3 + $0x3c] sm:$0xf]
    %v81 = vld [vmem:[#allocation3 + $0x40] sm:$0xf]
    %v82 = vld [vmem:[#allocation3 + $0x44] sm:$0xf]
    %v83 = vld [vmem:[#allocation3 + $0x48] sm:$0xf]
    %v84 = vld [vmem:[#allocation3 + $0x4c] sm:$0xf]
    %v85 = vld [vmem:[#allocation3 + $0x50] sm:$0xf]
    %v86 = vld [vmem:[#allocation3 + $0x54] sm:$0xf]
    %v109 = vunpack.c.l.b16 %v65
    %v110 = vunpack.c.l.b16 %v66
    %v111 = vunpack.c.l.b16 %v67
    %v112 = vunpack.c.l.b16 %v68
    %v113 = vunpack.c.l.b16 %v69
    %v114 = vunpack.c.l.b16 %v70
    %v115 = vunpack.c.l.b16 %v71
    %v116 = vunpack.c.l.b16 %v72
    %v117 = vunpack.c.l.b16 %v73
    %v118 = vunpack.c.l.b16 %v74
    %v119 = vunpack.c.l.b16 %v75
    %v120 = vunpack.c.l.b16 %v76
    %v121 = vunpack.c.l.b16 %v77
    %v122 = vunpack.c.l.b16 %v78
    %v123 = vunpack.c.l.b16 %v79
    %v124 = vunpack.c.l.b16 %v80
    %v125 = vunpack.c.l.b16 %v81
    %v126 = vunpack.c.l.b16 %v82
    %v127 = vunpack.c.l.b16 %v83
    %v128 = vunpack.c.l.b16 %v84
    %v129 = vunpack.c.l.b16 %v85
    %v130 = vunpack.c.l.b16 %v86
    %v131 = vpack.c.b16 %v110, %v109
    %v132 = vpack.c.b16 %v112, %v111
    %v133 = vpack.c.b16 %v114, %v113
    %v134 = vpack.c.b16 %v116, %v115
    %v135 = vpack.c.b16 %v118, %v117
    %v136 = vpack.c.b16 %v120, %v119
    %v137 = vpack.c.b16 %v122, %v121
    %v138 = vpack.c.b16 %v124, %v123
    %v139 = vpack.c.b16 %v126, %v125
    %v140 = vpack.c.b16 %v128, %v127
    %v141 = vpack.c.b16 %v130, %v129
    %v169 = vunpack.c.l.b16 %v49
    %v170 = vunpack.c.l.b16 %v50
    %v171 = vunpack.c.l.b16 %v51
    %v172 = vunpack.c.l.b16 %v52
    %v173 = vunpack.c.l.b16 %v53
    %v174 = vunpack.c.l.b16 %v54
    %v175 = vunpack.c.l.b16 %v55
    %v176 = vunpack.c.l.b16 %v56
    %v177 = vunpack.c.l.b16 %v57
    %v178 = vunpack.c.l.b16 %v58
    %v179 = vunpack.c.l.b16 %v59
    %v180 = vunpack.c.l.b16 %v60
    %v181 = vunpack.c.l.b16 %v61
    %v182 = vunpack.c.l.b16 %v62
    %v183 = vunpack.c.l.b16 %v63
    %v184 = vunpack.c.l.b16 %v64
    %v185 = vpack.c.b16 %v170, %v169
    %v186 = vpack.c.b16 %v172, %v171
    %v187 = vpack.c.b16 %v174, %v173
    %v188 = vpack.c.b16 %v176, %v175
    %v189 = vpack.c.b16 %v178, %v177
    %v190 = vpack.c.b16 %v180, %v179
    %v191 = vpack.c.b16 %v182, %v181
    %v192 = vpack.c.b16 %v184, %v183
    %201 = vmatprep.subr.bf16.mxu0 0
    %202 = vmatpush1.bf16.msra.mxu0 %v192
    %203 = vmatprep.subr.bf16.mxu0 0
    %204 = vmatpush1.bf16.msra.mxu0 %v191
    %205 = vmatprep.subr.bf16.mxu0 0
    %206 = vmatpush1.bf16.msra.mxu0 %v190
    %207 = vmatprep.subr.bf16.mxu0 0
    %208 = vmatpush1.bf16.msra.mxu0 %v189
    %209 = vmatprep.subr.bf16.mxu0 0
    %210 = vmatpush1.bf16.msra.mxu0 %v188
    %211 = vmatprep.subr.bf16.mxu0 0
    %212 = vmatpush1.bf16.msra.mxu0 %v187
    %213 = vmatprep.subr.bf16.mxu0 0
    %214 = vmatpush1.bf16.msra.mxu0 %v186
    %215 = vmatprep.subr.bf16.mxu0 0
    %216 = vmatpush1.bf16.msra.mxu0 %v185
    %217 = vmatprep.subr.bf16.mxu0 0
    %218 = vmatpush2.bf16.msra.mxu0 0
    %219 = vmatprep.subr.bf16.mxu0 0
    %220 = vmatpush2.bf16.msra.mxu0 0
    %221 = vmatprep.subr.bf16.mxu0 0
    %222 = vmatpush2.bf16.msra.mxu0 0
    %223 = vmatprep.subr.bf16.mxu0 0
    %224 = vmatpush2.bf16.msra.mxu0 0
    %225 = vmatprep.subr.bf16.mxu0 0
    %226 = vmatpush2.bf16.msra.mxu0 0
    %227 = vmatprep.subr.bf16.mxu0 0
    %228 = vmatpush2.bf16.msra.mxu0 0
    %229 = vmatprep.subr.bf16.mxu0 0
    %230 = vmatpush2.bf16.msra.mxu0 0
    %231 = vmatprep.subr.bf16.mxu0 0
    %232 = vmatpush2.bf16.msra.mxu0 0
    %233 = vmatprep.mubr.bf16.mxu0 0
    %234 = vmatmul.mubr.bf16.gmra.mxu0 %v131
    %v235 = vpop.f32.mrf.mxu0
    %v236 = vadd.f32 0.0, %v235
    %v237 = vpop.f32.mrf.mxu0
    %v238 = vpop.f32.mrf.mxu0
    %v239 = vadd.f32 0.0, %v238
    %v240 = vpop.f32.mrf.mxu0
    %241 = vmatprep.mubr.bf16.mxu0 0
    %242 = vmatmul.mubr.bf16.gmra.mxu0 %v132
    %v243 = vpop.f32.mrf.mxu0
    %v244 = vadd.f32 0.0, %v243
    %v245 = vpop.f32.mrf.mxu0
    %v246 = vpop.f32.mrf.mxu0
    %v247 = vadd.f32 0.0, %v246
    %v248 = vpop.f32.mrf.mxu0
    %249 = vmatprep.mubr.bf16.mxu0 0
    %250 = vmatmul.mubr.bf16.gmra.mxu0 %v133
    %v251 = vpop.f32.mrf.mxu0
    %v252 = vadd.f32 0.0, %v251
    %v253 = vpop.f32.mrf.mxu0
    %v254 = vpop.f32.mrf.mxu0
    %v255 = vadd.f32 0.0, %v254
    %v256 = vpop.f32.mrf.mxu0
    %257 = vmatprep.mubr.bf16.mxu0 0
    %258 = vmatmul.mubr.bf16.gmra.mxu0 %v134
    %v259 = vpop.f32.mrf.mxu0
    %v260 = vadd.f32 0.0, %v259
    %v261 = vpop.f32.mrf.mxu0
    %v262 = vpop.f32.mrf.mxu0
    %v263 = vadd.f32 0.0, %v262
    %v264 = vpop.f32.mrf.mxu0
    %265 = vmatprep.mubr.bf16.mxu0 0
    %266 = vmatmul.mubr.bf16.gmra.mxu0 %v135
    %v267 = vpop.f32.mrf.mxu0
    %v268 = vadd.f32 0.0, %v267
    %v269 = vpop.f32.mrf.mxu0
    %v270 = vpop.f32.mrf.mxu0
    %v271 = vadd.f32 0.0, %v270
    %v272 = vpop.f32.mrf.mxu0
    %273 = vmatprep.mubr.bf16.mxu0 0
    %274 = vmatmul.mubr.bf16.gmra.mxu0 %v136
    %v275 = vpop.f32.mrf.mxu0
    %v276 = vadd.f32 0.0, %v275
    %v277 = vpop.f32.mrf.mxu0
    %v278 = vpop.f32.mrf.mxu0
    %v279 = vadd.f32 0.0, %v278
    %v280 = vpop.f32.mrf.mxu0
    %281 = vmatprep.mubr.bf16.mxu0 0
    %282 = vmatmul.mubr.bf16.gmra.mxu0 %v137
    %v283 = vpop.f32.mrf.mxu0
    %v284 = vadd.f32 0.0, %v283
    %v285 = vpop.f32.mrf.mxu0
    %v286 = vpop.f32.mrf.mxu0
    %v287 = vadd.f32 0.0, %v286
    %v288 = vpop.f32.mrf.mxu0
    %289 = vmatprep.mubr.bf16.mxu0 0
    %290 = vmatmul.mubr.bf16.gmra.mxu0 %v138
    %v291 = vpop.f32.mrf.mxu0
    %v292 = vadd.f32 0.0, %v291
    %v293 = vpop.f32.mrf.mxu0
    %v294 = vpop.f32.mrf.mxu0
    %v295 = vadd.f32 0.0, %v294
    %v296 = vpop.f32.mrf.mxu0
    %297 = vmatprep.mubr.bf16.mxu0 0
    %298 = vmatmul.mubr.bf16.gmra.mxu0 %v139
    %v299 = vpop.f32.mrf.mxu0
    %v300 = vadd.f32 0.0, %v299
    %v301 = vpop.f32.mrf.mxu0
    %v302 = vpop.f32.mrf.mxu0
    %v303 = vadd.f32 0.0, %v302
    %v304 = vpop.f32.mrf.mxu0
    %305 = vmatprep.mubr.bf16.mxu0 0
    %306 = vmatmul.mubr.bf16.gmra.mxu0 %v140
    %v307 = vpop.f32.mrf.mxu0
    %v308 = vadd.f32 0.0, %v307
    %v309 = vpop.f32.mrf.mxu0
    %v310 = vpop.f32.mrf.mxu0
    %v311 = vadd.f32 0.0, %v310
    %v312 = vpop.f32.mrf.mxu0
    %313 = vmatprep.mubr.bf16.mxu0 0
    %314 = vmatmul.mubr.bf16.gmra.mxu0 %v141
    %v315 = vpop.f32.mrf.mxu0
    %v316 = vadd.f32 0.0, %v315
    %v317 = vpop.f32.mrf.mxu0
    %v318 = vpop.f32.mrf.mxu0
    %v319 = vadd.f32 0.0, %v318
    %v320 = vpop.f32.mrf.mxu0
    %321 = vdwg.mxu0
    %p322 = scmp.eq.s32.totalorder 0, 0
    // Predicated region
    $region22: #{tpu_custom_call.1} parent=1 // pred_check
      %p323 = pneg %p322
    $region23: #{tpu_custom_call.1} parent=1 // pred_check_branch
      %325 = sbr.rel (%p323) target = $region25
    $region24: #{tpu_custom_call.1} parent=1 // pred_region
      %326 = vst [vmem:[#allocation2] sm:$0xff] %v236
      %327 = vst [vmem:[#allocation2 + $0x8] sm:$0xff] %v239
      %328 = vst [vmem:[#allocation2 + $0x10] sm:$0xff] %v244
      %329 = vst [vmem:[#allocation2 + $0x18] sm:$0xff] %v247
      %330 = vst [vmem:[#allocation2 + $0x20] sm:$0xff] %v252
      %331 = vst [vmem:[#allocation2 + $0x28] sm:$0xff] %v255
      %332 = vst [vmem:[#allocation2 + $0x30] sm:$0xff] %v260
      %333 = vst [vmem:[#allocation2 + $0x38] sm:$0xff] %v263
      %334 = vst [vmem:[#allocation2 + $0x40] sm:$0xff] %v268
      %335 = vst [vmem:[#allocation2 + $0x48] sm:$0xff] %v271
      %336 = vst [vmem:[#allocation2 + $0x50] sm:$0xff] %v276
      %337 = vst [vmem:[#allocation2 + $0x58] sm:$0xff] %v279
      %338 = vst [vmem:[#allocation2 + $0x60] sm:$0xff] %v284
      %339 = vst [vmem:[#allocation2 + $0x68] sm:$0xff] %v287
      %340 = vst [vmem:[#allocation2 + $0x70] sm:$0xff] %v292
      %341 = vst [vmem:[#allocation2 + $0x78] sm:$0xff] %v295
      %342 = vst [vmem:[#allocation2 + $0x80] sm:$0xff] %v300
      %343 = vst [vmem:[#allocation2 + $0x88] sm:$0xff] %v303
      %344 = vst [vmem:[#allocation2 + $0x90] sm:$0xff] %v308
      %345 = vst [vmem:[#allocation2 + $0x98] sm:$0xff] %v311
      %346 = vst [vmem:[#allocation2 + $0xa0] sm:$0xff] %v316
      %347 = vst [vmem:[#allocation2 + $0xa8] sm:$0xff] %v319
    $region25: #{tpu_custom_call.1} parent=1 // pred_fallthru
      _
    %p348 = scmp.gt.s32.totalorder 0, 0
    // Predicated region
    $region26: #{tpu_custom_call.1} parent=1 // pred_check
      %p349 = pneg %p348
    $region27: #{tpu_custom_call.1} parent=1 // pred_check_branch
      %351 = sbr.rel (%p349) target = $region29
    $region28: #{tpu_custom_call.1} parent=1 // pred_region
      %v352 = vld [vmem:[#allocation2] sm:$0xff]
      %v353 = vld [vmem:[#allocation2 + $0x8] sm:$0xff]
      %v354 = vld [vmem:[#allocation2 + $0x10] sm:$0xff]
      %v355 = vld [vmem:[#allocation2 + $0x18] sm:$0xff]
      %v356 = vld [vmem:[#allocation2 + $0x20] sm:$0xff]
      %v357 = vld [vmem:[#allocation2 + $0x28] sm:$0xff]
      %v358 = vld [vmem:[#allocation2 + $0x30] sm:$0xff]
      %v359 = vld [vmem:[#allocation2 + $0x38] sm:$0xff]
      %v360 = vld [vmem:[#allocation2 + $0x40] sm:$0xff]
      %v361 = vld [vmem:[#allocation2 + $0x48] sm:$0xff]
      %v362 = vld [vmem:[#allocation2 + $0x50] sm:$0xff]
      %v363 = vld [vmem:[#allocation2 + $0x58] sm:$0xff]
      %v364 = vld [vmem:[#allocation2 + $0x60] sm:$0xff]
      %v365 = vld [vmem:[#allocation2 + $0x68] sm:$0xff]
      %v366 = vld [vmem:[#allocation2 + $0x70] sm:$0xff]
      %v367 = vld [vmem:[#allocation2 + $0x78] sm:$0xff]
      %v368 = vld [vmem:[#allocation2 + $0x80] sm:$0xff]
      %v369 = vld [vmem:[#allocation2 + $0x88] sm:$0xff]
      %v370 = vld [vmem:[#allocation2 + $0x90] sm:$0xff]
      %v371 = vld [vmem:[#allocation2 + $0x98] sm:$0xff]
      %v372 = vld [vmem:[#allocation2 + $0xa0] sm:$0xff]
      %v373 = vld [vmem:[#allocation2 + $0xa8] sm:$0xff]
      %v374 = vadd.f32 %v352, %v236
      %v375 = vadd.f32 %v353, %v239
      %v376 = vadd.f32 %v354, %v244
      %v377 = vadd.f32 %v355, %v247
      %v378 = vadd.f32 %v356, %v252
      %v379 = vadd.f32 %v357, %v255
      %v380 = vadd.f32 %v358, %v260
      %v381 = vadd.f32 %v359, %v263
      %v382 = vadd.f32 %v360, %v268
      %v383 = vadd.f32 %v361, %v271
      %v384 = vadd.f32 %v362, %v276
      %v385 = vadd.f32 %v363, %v279
      %v386 = vadd.f32 %v364, %v284
      %v387 = vadd.f32 %v365, %v287
      %v388 = vadd.f32 %v366, %v292
      %v389 = vadd.f32 %v367, %v295
      %v390 = vadd.f32 %v368, %v300
      %v391 = vadd.f32 %v369, %v303
      %v392 = vadd.f32 %v370, %v308
      %v393 = vadd.f32 %v371, %v311
      %v394 = vadd.f32 %v372, %v316
      %v395 = vadd.f32 %v373, %v319
      %396 = vst [vmem:[#allocation2] sm:$0xff] %v374
      %397 = vst [vmem:[#allocation2 + $0x8] sm:$0xff] %v375
      %398 = vst [vmem:[#allocation2 + $0x10] sm:$0xff] %v376
      %399 = vst [vmem:[#allocation2 + $0x18] sm:$0xff] %v377
      %400 = vst [vmem:[#allocation2 + $0x20] sm:$0xff] %v378
      %401 = vst [vmem:[#allocation2 + $0x28] sm:$0xff] %v379
      %402 = vst [vmem:[#allocation2 + $0x30] sm:$0xff] %v380
      %403 = vst [vmem:[#allocation2 + $0x38] sm:$0xff] %v381
      %404 = vst [vmem:[#allocation2 + $0x40] sm:$0xff] %v382
      %405 = vst [vmem:[#allocation2 + $0x48] sm:$0xff] %v383
      %406 = vst [vmem:[#allocation2 + $0x50] sm:$0xff] %v384
      %407 = vst [vmem:[#allocation2 + $0x58] sm:$0xff] %v385
      %408 = vst [vmem:[#allocation2 + $0x60] sm:$0xff] %v386
      %409 = vst [vmem:[#allocation2 + $0x68] sm:$0xff] %v387
      %410 = vst [vmem:[#allocation2 + $0x70] sm:$0xff] %v388
      %411 = vst [vmem:[#allocation2 + $0x78] sm:$0xff] %v389
      %412 = vst [vmem:[#allocation2 + $0x80] sm:$0xff] %v390
      %413 = vst [vmem:[#allocation2 + $0x88] sm:$0xff] %v391
      %414 = vst [vmem:[#allocation2 + $0x90] sm:$0xff] %v392
      %415 = vst [vmem:[#allocation2 + $0x98] sm:$0xff] %v393
      %416 = vst [vmem:[#allocation2 + $0xa0] sm:$0xff] %v394
      %417 = vst [vmem:[#allocation2 + $0xa8] sm:$0xff] %v395
    $region29: #{tpu_custom_call.1} parent=1 // pred_fallthru
      _
    // Predicated region
    $region30: #{tpu_custom_call.1} parent=1 // pred_check
      %p418 = pneg %p322
    $region31: #{tpu_custom_call.1} parent=1 // pred_check_branch
      %420 = sbr.rel (%p418) target = $region33
    $region32: #{tpu_custom_call.1} parent=1 // pred_region
      %v421 = vld [vmem:[#allocation2] sm:$0xff]
      %v422 = vld [vmem:[#allocation2 + $0x8] sm:$0xff]
      %v423 = vld [vmem:[#allocation2 + $0x10] sm:$0xff]
      %v424 = vld [vmem:[#allocation2 + $0x18] sm:$0xff]
      %v425 = vld [vmem:[#allocation2 + $0x20] sm:$0xff]
      %v426 = vld [vmem:[#allocation2 + $0x28] sm:$0xff]
      %v427 = vld [vmem:[#allocation2 + $0x30] sm:$0xff]
      %v428 = vld [vmem:[#allocation2 + $0x38] sm:$0xff]
      %v429 = vld [vmem:[#allocation2 + $0x40] sm:$0xff]
      %v430 = vld [vmem:[#allocation2 + $0x48] sm:$0xff]
      %v431 = vld [vmem:[#allocation2 + $0x50] sm:$0xff]
      %v432 = vld [vmem:[#allocation2 + $0x58] sm:$0xff]
      %v433 = vld [vmem:[#allocation2 + $0x60] sm:$0xff]
      %v434 = vld [vmem:[#allocation2 + $0x68] sm:$0xff]
      %v435 = vld [vmem:[#allocation2 + $0x70] sm:$0xff]
      %v436 = vld [vmem:[#allocation2 + $0x78] sm:$0xff]
      %v437 = vld [vmem:[#allocation2 + $0x80] sm:$0xff]
      %v438 = vld [vmem:[#allocation2 + $0x88] sm:$0xff]
      %v439 = vld [vmem:[#allocation2 + $0x90] sm:$0xff]
      %v440 = vld [vmem:[#allocation2 + $0x98] sm:$0xff]
      %v441 = vld [vmem:[#allocation2 + $0xa0] sm:$0xff]
      %v442 = vld [vmem:[#allocation2 + $0xa8] sm:$0xff]
      %v443 = vld [vmem:[%s2] sm:$0x1]
      %v445 = vlaneseq
      %v446 = vshrl.u32 %v445, 7
      %v447 = vsub.s32 0, %v446
      %v448 = vrot.slane %v443, %v447
      %v450 = vadd.f32 %v421, %v448
      %v451 = vadd.f32 %v422, %v448
      %v452 = vadd.f32 %v423, %v448
      %v453 = vadd.f32 %v424, %v448
      %v454 = vadd.f32 %v425, %v448
      %v455 = vadd.f32 %v426, %v448
      %v456 = vadd.f32 %v427, %v448
      %v457 = vadd.f32 %v428, %v448
      %v458 = vadd.f32 %v429, %v448
      %v459 = vadd.f32 %v430, %v448
      %v460 = vadd.f32 %v431, %v448
      %v461 = vadd.f32 %v432, %v448
      %v462 = vadd.f32 %v433, %v448
      %v463 = vadd.f32 %v434, %v448
      %v464 = vadd.f32 %v435, %v448
      %v465 = vadd.f32 %v436, %v448
      %v466 = vadd.f32 %v437, %v448
      %v467 = vadd.f32 %v438, %v448
      %v468 = vadd.f32 %v439, %v448
      %v469 = vadd.f32 %v440, %v448
      %v470 = vadd.f32 %v441, %v448
      %v471 = vadd.f32 %v442, %v448
      %vm472 = vcmp.ge.f32.partialorder %v450, 0.0
      %vm473 = vcmp.ge.f32.partialorder %v451, 0.0
      %vm474 = vcmp.ge.f32.partialorder %v452, 0.0
      %vm475 = vcmp.ge.f32.partialorder %v453, 0.0
      %vm476 = vcmp.ge.f32.partialorder %v454, 0.0
      %vm477 = vcmp.ge.f32.partialorder %v455, 0.0
      %vm478 = vcmp.ge.f32.partialorder %v456, 0.0
      %vm479 = vcmp.ge.f32.partialorder %v457, 0.0
      %vm480 = vcmp.ge.f32.partialorder %v458, 0.0
      %vm481 = vcmp.ge.f32.partialorder %v459, 0.0
      %vm482 = vcmp.ge.f32.partialorder %v460, 0.0
      %vm483 = vcmp.ge.f32.partialorder %v461, 0.0
      %vm484 = vcmp.ge.f32.partialorder %v462, 0.0
      %vm485 = vcmp.ge.f32.partialorder %v463, 0.0
      %vm486 = vcmp.ge.f32.partialorder %v464, 0.0
      %vm487 = vcmp.ge.f32.partialorder %v465, 0.0
      %vm488 = vcmp.ge.f32.partialorder %v466, 0.0
      %vm489 = vcmp.ge.f32.partialorder %v467, 0.0
      %vm490 = vcmp.ge.f32.partialorder %v468, 0.0
      %vm491 = vcmp.ge.f32.partialorder %v469, 0.0
      %vm492 = vcmp.ge.f32.partialorder %v470, 0.0
      %vm493 = vcmp.ge.f32.partialorder %v471, 0.0
      %v494 = vmul.f32 %v450, 0.2
      %v495 = vmul.f32 %v451, 0.2
      %v496 = vmul.f32 %v452, 0.2
      %v497 = vmul.f32 %v453, 0.2
      %v498 = vmul.f32 %v454, 0.2
      %v499 = vmul.f32 %v455, 0.2
      %v500 = vmul.f32 %v456, 0.2
      %v501 = vmul.f32 %v457, 0.2
      %v502 = vmul.f32 %v458, 0.2
      %v503 = vmul.f32 %v459, 0.2
      %v504 = vmul.f32 %v460, 0.2
      %v505 = vmul.f32 %v461, 0.2
      %v506 = vmul.f32 %v462, 0.2
      %v507 = vmul.f32 %v463, 0.2
      %v508 = vmul.f32 %v464, 0.2
      %v509 = vmul.f32 %v465, 0.2
      %v510 = vmul.f32 %v466, 0.2
      %v511 = vmul.f32 %v467, 0.2
      %v512 = vmul.f32 %v468, 0.2
      %v513 = vmul.f32 %v469, 0.2
      %v514 = vmul.f32 %v470, 0.2
      %v515 = vmul.f32 %v471, 0.2
      %v516 = vsel %vm472, %v450, %v494
      %v517 = vsel %vm473, %v451, %v495
      %v518 = vsel %vm474, %v452, %v496
      %v519 = vsel %vm475, %v453, %v497
      %v520 = vsel %vm476, %v454, %v498
      %v521 = vsel %vm477, %v455, %v499
      %v522 = vsel %vm478, %v456, %v500
      %v523 = vsel %vm479, %v457, %v501
      %v524 = vsel %vm480, %v458, %v502
      %v525 = vsel %vm481, %v459, %v503
      %v526 = vsel %vm482, %v460, %v504
      %v527 = vsel %vm483, %v461, %v505
      %v528 = vsel %vm484, %v462, %v506
      %v529 = vsel %vm485, %v463, %v507
      %v530 = vsel %vm486, %v464, %v508
      %v531 = vsel %vm487, %v465, %v509
      %v532 = vsel %vm488, %v466, %v510
      %v533 = vsel %vm489, %v467, %v511
      %v534 = vsel %vm490, %v468, %v512
      %v535 = vsel %vm491, %v469, %v513
      %v536 = vsel %vm492, %v470, %v514
      %v537 = vsel %vm493, %v471, %v515
      %v538 = vpack.c.bf16 %v517, %v516
      %v539 = vpack.c.bf16 %v519, %v518
      %v540 = vpack.c.bf16 %v521, %v520
      %v541 = vpack.c.bf16 %v523, %v522
      %v542 = vpack.c.bf16 %v525, %v524
      %v543 = vpack.c.bf16 %v527, %v526
      %v544 = vpack.c.bf16 %v529, %v528
      %v545 = vpack.c.bf16 %v531, %v530
      %v546 = vpack.c.bf16 %v533, %v532
      %v547 = vpack.c.bf16 %v535, %v534
      %v548 = vpack.c.bf16 %v537, %v536
      %v560 = vunpack.c.l.b16 %v538
      %v561 = vunpack.c.h.b16 %v538
      %v562 = vunpack.c.l.b16 %v539
      %v563 = vunpack.c.h.b16 %v539
      %v564 = vunpack.c.l.b16 %v540
      %v565 = vunpack.c.h.b16 %v540
      %v566 = vunpack.c.l.b16 %v541
      %v567 = vunpack.c.h.b16 %v541
      %v568 = vunpack.c.l.b16 %v542
      %v569 = vunpack.c.h.b16 %v542
      %v570 = vunpack.c.l.b16 %v543
      %v571 = vunpack.c.h.b16 %v543
      %v572 = vunpack.c.l.b16 %v544
      %v573 = vunpack.c.h.b16 %v544
      %v574 = vunpack.c.l.b16 %v545
      %v575 = vunpack.c.h.b16 %v545
      %v576 = vunpack.c.l.b16 %v546
      %v577 = vunpack.c.h.b16 %v546
      %v578 = vunpack.c.l.b16 %v547
      %v579 = vunpack.c.h.b16 %v547
      %v580 = vunpack.c.l.b16 %v548
      %v581 = vunpack.c.h.b16 %v548
      %v582 = vpack.c.b16 %v560, %v560
      %v583 = vpack.c.b16 %v561, %v561
      %v584 = vpack.c.b16 %v562, %v562
      %v585 = vpack.c.b16 %v563, %v563
      %v586 = vpack.c.b16 %v564, %v564
      %v587 = vpack.c.b16 %v565, %v565
      %v588 = vpack.c.b16 %v566, %v566
      %v589 = vpack.c.b16 %v567, %v567
      %v590 = vpack.c.b16 %v568, %v568
      %v591 = vpack.c.b16 %v569, %v569
      %v592 = vpack.c.b16 %v570, %v570
      %v593 = vpack.c.b16 %v571, %v571
      %v594 = vpack.c.b16 %v572, %v572
      %v595 = vpack.c.b16 %v573, %v573
      %v596 = vpack.c.b16 %v574, %v574
      %v597 = vpack.c.b16 %v575, %v575
      %v598 = vpack.c.b16 %v576, %v576
      %v599 = vpack.c.b16 %v577, %v577
      %v600 = vpack.c.b16 %v578, %v578
      %v601 = vpack.c.b16 %v579, %v579
      %v602 = vpack.c.b16 %v580, %v580
      %v603 = vpack.c.b16 %v581, %v581
      %626 = vst [vmem:[#allocation8] sm:$0xf] %v582
      %627 = vst [vmem:[#allocation8 + $0x4] sm:$0xf] %v583
      %628 = vst [vmem:[#allocation8 + $0x8] sm:$0xf] %v584
      %629 = vst [vmem:[#allocation8 + $0xc] sm:$0xf] %v585
      %630 = vst [vmem:[#allocation8 + $0x10] sm:$0xf] %v586
      %631 = vst [vmem:[#allocation8 + $0x14] sm:$0xf] %v587
      %632 = vst [vmem:[#allocation8 + $0x18] sm:$0xf] %v588
      %633 = vst [vmem:[#allocation8 + $0x1c] sm:$0xf] %v589
      %634 = vst [vmem:[#allocation8 + $0x20] sm:$0xf] %v590
      %635 = vst [vmem:[#allocation8 + $0x24] sm:$0xf] %v591
      %636 = vst [vmem:[#allocation8 + $0x28] sm:$0xf] %v592
      %637 = vst [vmem:[#allocation8 + $0x2c] sm:$0xf] %v593
      %638 = vst [vmem:[#allocation8 + $0x30] sm:$0xf] %v594
      %639 = vst [vmem:[#allocation8 + $0x34] sm:$0xf] %v595
      %640 = vst [vmem:[#allocation8 + $0x38] sm:$0xf] %v596
      %641 = vst [vmem:[#allocation8 + $0x3c] sm:$0xf] %v597
      %642 = vst [vmem:[#allocation8 + $0x40] sm:$0xf] %v598
      %643 = vst [vmem:[#allocation8 + $0x44] sm:$0xf] %v599
      %644 = vst [vmem:[#allocation8 + $0x48] sm:$0xf] %v600
      %645 = vst [vmem:[#allocation8 + $0x4c] sm:$0xf] %v601
      %646 = vst [vmem:[#allocation8 + $0x50] sm:$0xf] %v602
      %647 = vst [vmem:[#allocation8 + $0x54] sm:$0xf] %v603
    $region33: #{tpu_custom_call.1} parent=1 // pred_fallthru
      _
    // Predicated region
    $region34: #{tpu_custom_call.1} parent=1 // pred_check
      _
    $region35: #{tpu_custom_call.1} parent=1 // pred_check_branch
      %649 = sbr.rel (0) target = $region37
    $region36: #{tpu_custom_call.1} parent=1 // pred_region
      %s651 = ssub.s32 1408, 1408
      %652 = vsyncadd [#allocation5], %s651
      %s653 = sshll.u32 [#allocation8], 4
      %s654 = int_to_ptr.vmem [resolvable:$true] %s653
      %659 = dma.vmem_to_hbm [thread:$0]  %s654, 1408, %s3, [#allocation5], 64, 64, 4
    $region37: #{tpu_custom_call.1} parent=1 // pred_fallthru
      _
    // Predicated region
    $region38: #{tpu_custom_call.1} parent=1 // pred_check
      _
    $region39: #{tpu_custom_call.1} parent=1 // pred_check_branch
      %661 = sbr.rel (0) target = $region41
    $region40: #{tpu_custom_call.1} parent=1 // pred_region
      %662 = dma.done [#allocation5], 1408
    $region41: #{tpu_custom_call.1} parent=1 // pred_fallthru
      _
    %663 = vsyncpa [#allocation4], 1
    %664 = vsyncpa [#allocation7], 1
    %665 = vsyncpa [#allocation5], 1

</llo_original>
